<compile_context>
chip_gen: v5e
topology: v5e:2x2
jax: 0.10.0
libtpu: 0.0.40
codegen_flags: <defaults>
</compile_context>

<pallas_src>
import jax
import jax.numpy as jnp
import numpy as np
from jax.experimental import pallas as pl
from jax.experimental.pallas import tpu as pltpu

D = 64             # input feature dim
HIDDEN = 128       # hidden width
CLASS_NUM = 8      # output classes (real logit width, no padding)
BN_EPS = 1e-5
NEG_SLOPE = 0.1
MAX_TILE_N = 4096  # row tile; ~12-14 MiB/step VMEM incl. double buffers -> fits all gens


def _position_classifier_kernel(x1_ref, x2_ref, w1_ref, t1_ref,
                                w2_ref, t2_ref, w3_ref, b3_ref, out_ref):
    # Subtraction in f32 (avoids bf16 cancellation when h1 ~= h2), then bf16 for MXU.
    xd = (x1_ref[...] - x2_ref[...]).astype(jnp.bfloat16)          # (tile_n, 64)

    # Layer 1: xd @ (W1t * s1) + t1, LeakyReLU(0.1).  BN scale folded into weights.
    h = jnp.dot(xd, w1_ref[...], preferred_element_type=jnp.float32)
    h = h + t1_ref[...]
    h = jnp.maximum(h, NEG_SLOPE * h)

    # Layer 2: Linear(128,128) with folded BN scale, + shift, LeakyReLU(0.1).
    h = jnp.dot(h.astype(jnp.bfloat16), w2_ref[...],
                preferred_element_type=jnp.float32)
    h = h + t2_ref[...]
    h = jnp.maximum(h, NEG_SLOPE * h)

    # NormalizedLinear(128, class_num): columns pre-normalized in the wrapper.
    y = jnp.dot(h.astype(jnp.bfloat16), w3_ref[...],
                preferred_element_type=jnp.float32)                 # (tile_n, 8)
    out_ref[...] = (y + b3_ref[...]).astype(out_ref.dtype)


def init_params(key):
    ks = jax.random.split(key, 8)
    p = {}
    # Linear 1: (out=128, in=64) like nn.Linear
    p["w1"] = jax.random.normal(ks[0], (HIDDEN, D), jnp.float32) * 0.05
    p["b1"] = jax.random.normal(ks[1], (HIDDEN,), jnp.float32) * 0.01
    p["bn1_gamma"] = 1.0 + 0.1 * jax.random.normal(ks[2], (HIDDEN,), jnp.float32)
    p["bn1_beta"] = 0.1 * jax.random.normal(ks[3], (HIDDEN,), jnp.float32)
    p["bn1_mean"] = jnp.zeros((HIDDEN,), jnp.float32)
    p["bn1_var"] = jnp.ones((HIDDEN,), jnp.float32)
    # Linear 2: (128, 128)
    p["w2"] = jax.random.normal(ks[4], (HIDDEN, HIDDEN), jnp.float32) * 0.05
    p["b2"] = jax.random.normal(ks[5], (HIDDEN,), jnp.float32) * 0.01
    p["bn2_gamma"] = jnp.ones((HIDDEN,), jnp.float32)
    p["bn2_beta"] = jnp.zeros((HIDDEN,), jnp.float32)
    p["bn2_mean"] = jnp.zeros((HIDDEN,), jnp.float32)
    p["bn2_var"] = jnp.ones((HIDDEN,), jnp.float32)
    # NormalizedLinear: weight (class_num, 128), bias (class_num,)
    p["w3"] = jax.random.normal(ks[6], (CLASS_NUM, HIDDEN), jnp.float32) * 0.05
    p["b3"] = jax.random.normal(ks[7], (CLASS_NUM,), jnp.float32) * 0.01
    return p


def _fold_linear_bn(w, b, gamma, beta, mean, var):
    """Fold Linear bias + inference BatchNorm into (W^T * scale, shift)."""
    s = gamma / jnp.sqrt(var + BN_EPS)                 # (out,)
    t = (b - mean) * s + beta                          # (out,)
    w_scaled = w.T * s.reshape(1, -1)                  # (in, out), BN scale folded in
    return w_scaled, t.reshape(1, -1)                  # (in,out), (1,out)


@jax.jit
def position_classifier_forward(h1, h2, params):
    # ---- parameter prep (trace-time / tiny): BN folding, w3 column norm ----
    x1 = h1.reshape(-1, D).astype(jnp.float32)
    x2 = h2.reshape(-1, D).astype(jnp.float32)
    N = x1.shape[0]

    w1s, t1 = _fold_linear_bn(params["w1"], params["b1"],
                              params["bn1_gamma"], params["bn1_beta"],
                              params["bn1_mean"], params["bn1_var"])
    w1b = w1s.astype(jnp.bfloat16)                                    # (64, 128)

    w2s, t2 = _fold_linear_bn(params["w2"], params["b2"],
                              params["bn2_gamma"], params["bn2_beta"],
                              params["bn2_mean"], params["bn2_var"])
    w2b = w2s.astype(jnp.bfloat16)                                    # (128, 128)

    # NormalizedLinear: weight / weight.norm(dim=0) (across classes), as in Patch-SVDD.
    w3 = params["w3"]                                                 # (8, 128)
    w3n = w3 / jnp.linalg.norm(w3, axis=0, keepdims=True)
    w3b = w3n.T.astype(jnp.bfloat16)                                  # (128, 8)
    b3 = params["b3"].reshape(1, -1).astype(jnp.float32)              # (1, 8)

    # ---- tile selection: sublane-aligned, >= 2 grid steps where possible (v7x) ----
    half_rows = ((pl.cdiv(N, 2) + 7) // 8) * 8
    tile_n = int(min(MAX_TILE_N, max(8, half_rows)))
    grid = (pl.cdiv(N, tile_n),)
    resident = lambda i: (0, 0)                                       # weights stay in VMEM

    flops = 2 * N * (D * HIDDEN + HIDDEN * HIDDEN + HIDDEN * CLASS_NUM)
    bytes_accessed = (2 * N * D * 4                                   # two f32 inputs
                      + N * CLASS_NUM * 4                             # f32 logits out
                      + (D * HIDDEN + HIDDEN * HIDDEN + HIDDEN * CLASS_NUM) * 2
                      + 2 * HIDDEN * 4 + CLASS_NUM * 4)               # bf16 W + f32 shifts/bias

    out = pl.pallas_call(
        _position_classifier_kernel,
        out_shape=jax.ShapeDtypeStruct((N, CLASS_NUM), jnp.float32),
        grid=grid,
        in_specs=[
            pl.BlockSpec((tile_n, D), lambda i: (i, 0)),      # x1 tile (f32)
            pl.BlockSpec((tile_n, D), lambda i: (i, 0)),      # x2 tile (f32)
            pl.BlockSpec((D, HIDDEN), resident),              # W1^T * s1   (bf16)
            pl.BlockSpec((1, HIDDEN), resident),              # t1          (f32)
            pl.BlockSpec((HIDDEN, HIDDEN), resident),         # W2^T * s2   (bf16)
            pl.BlockSpec((1, HIDDEN), resident),              # t2          (f32)
            pl.BlockSpec((HIDDEN, CLASS_NUM), resident),      # W3 normalized (bf16)
            pl.BlockSpec((1, CLASS_NUM), resident),           # b3          (f32)
        ],
        out_specs=pl.BlockSpec((tile_n, CLASS_NUM), lambda i: (i, 0)),
        compiler_params=pltpu.CompilerParams(
            dimension_semantics=("parallel",)),
        cost_estimate=pl.CostEstimate(flops=flops,
                                      transcendentals=0,
                                      bytes_accessed=bytes_accessed),
    )(x1, x2, w1b, t1, w2b, t2, w3b, b3)

    return out


def _reference_forward(h1, h2, params):
    x = h1.reshape(-1, D) - h2.reshape(-1, D)

    def lin_bn_lrelu(x, w, b, g, bt, m, v):
        y = x @ w.T + b
        y = (y - m) / jnp.sqrt(v + BN_EPS) * g + bt
        return jnp.where(y >= 0, y, NEG_SLOPE * y)

    h = lin_bn_lrelu(x, params["w1"], params["b1"], params["bn1_gamma"],
                     params["bn1_beta"], params["bn1_mean"], params["bn1_var"])
    h = lin_bn_lrelu(h, params["w2"], params["b2"], params["bn2_gamma"],
                     params["bn2_beta"], params["bn2_mean"], params["bn2_var"])
    w3 = params["w3"]
    w3n = w3 / jnp.linalg.norm(w3, axis=0, keepdims=True)
    return h @ w3n.T + params["b3"]


if __name__ == "__main__":
    key = jax.random.PRNGKey(0)
    kp, k1, k2 = jax.random.split(key, 3)
    params = init_params(kp)

    # Small shapes: batch=2, K=8 patch positions, D=64  -> view(-1, 64) gives N=16
    h1 = jax.random.normal(k1, (2, 8, D), jnp.float32)
    h2 = jax.random.normal(k2, (2, 8, D), jnp.float32)

    out = position_classifier_forward(h1, h2, params)
    out = jax.block_until_ready(out)

    ref = _reference_forward(h1, h2, params)
    # bf16 matmul operands (f32 subtraction + f32 accumulation) -> modest tolerance.
    np.testing.assert_allclose(np.asarray(out), np.asarray(ref), rtol=3e-2, atol=3e-2)

    assert out.shape == (16, CLASS_NUM)
    print("KERNEL_OK")
</pallas_src>

<mosaic_0001>
module attributes {stable_mosaic.version = 11 : i64} {
  func.func @_position_classifier_kernel(%arg0: i32, %arg1: memref<8x64xf32, #tpu.memory_space<vmem>>, %arg2: memref<8x64xf32, #tpu.memory_space<vmem>>, %arg3: memref<64x128xbf16, #tpu.memory_space<vmem>>, %arg4: memref<1x128xf32, #tpu.memory_space<vmem>>, %arg5: memref<128x128xbf16, #tpu.memory_space<vmem>>, %arg6: memref<1x128xf32, #tpu.memory_space<vmem>>, %arg7: memref<128x8xbf16, #tpu.memory_space<vmem>>, %arg8: memref<1x8xf32, #tpu.memory_space<vmem>>, %arg9: memref<8x8xf32, #tpu.memory_space<vmem>>) attributes {dimension_semantics = [#tpu.dimension_semantics<parallel>], iteration_bounds = array<i64: 2>, scalar_prefetch = 0 : i64, scratch_operands = 0 : i64, tpu.core_type = #tpu.core_type<tc>, window_params = [{transform_indices = @transform_0, window_bounds = array<i64: 8, 64>}, {transform_indices = @transform_1, window_bounds = array<i64: 8, 64>}, {pipeline_mode = #tpu.pipeline_mode<synchronous>, transform_indices = @transform_2, window_bounds = array<i64: 64, 128>}, {pipeline_mode = #tpu.pipeline_mode<synchronous>, transform_indices = @transform_3, window_bounds = array<i64: 1, 128>}, {pipeline_mode = #tpu.pipeline_mode<synchronous>, transform_indices = @transform_4, window_bounds = array<i64: 128, 128>}, {pipeline_mode = #tpu.pipeline_mode<synchronous>, transform_indices = @transform_5, window_bounds = array<i64: 1, 128>}, {pipeline_mode = #tpu.pipeline_mode<synchronous>, transform_indices = @transform_6, window_bounds = array<i64: 128, 8>}, {pipeline_mode = #tpu.pipeline_mode<synchronous>, transform_indices = @transform_7, window_bounds = array<i64: 1, 8>}, {transform_indices = @transform_8, window_bounds = array<i64: 8, 8>}]} {
    %c0 = arith.constant 0 : index
    %c0_0 = arith.constant 0 : index
    %0 = vector.load %arg1[%c0, %c0_0] : memref<8x64xf32, #tpu.memory_space<vmem>>, vector<8x64xf32>
    %c0_1 = arith.constant 0 : index
    %c0_2 = arith.constant 0 : index
    %1 = vector.load %arg2[%c0_1, %c0_2] : memref<8x64xf32, #tpu.memory_space<vmem>>, vector<8x64xf32>
    %2 = arith.subf %0, %1 : vector<8x64xf32>
    %3 = arith.truncf %2 : vector<8x64xf32> to vector<8x64xbf16>
    %c0_3 = arith.constant 0 : index
    %c0_4 = arith.constant 0 : index
    %4 = vector.load %arg3[%c0_3, %c0_4] : memref<64x128xbf16, #tpu.memory_space<vmem>>, vector<64x128xbf16>
    %cst = arith.constant dense<0.000000e+00> : vector<8x128xf32>
    %5 = tpu.matmul %3, %4, %cst {dimension_numbers = #tpu.dot_dimension_numbers<[1], [0], [0], [1], [0, 0, 1, 1], [], []>} : vector<8x64xbf16>, vector<64x128xbf16>, vector<8x128xf32> -> vector<8x128xf32>
    %c0_5 = arith.constant 0 : index
    %c0_6 = arith.constant 0 : index
    %6 = vector.load %arg4[%c0_5, %c0_6] : memref<1x128xf32, #tpu.memory_space<vmem>>, vector<1x128xf32>
    %7 = vector.broadcast %6 : vector<1x128xf32> to vector<8x128xf32>
    %8 = arith.addf %5, %7 : vector<8x128xf32>
    %cst_7 = arith.constant 1.000000e-01 : f32
    %9 = vector.broadcast %cst_7 : f32 to vector<8x128xf32>
    %10 = arith.mulf %9, %8 : vector<8x128xf32>
    %11 = arith.maximumf %8, %10 : vector<8x128xf32>
    %12 = arith.truncf %11 : vector<8x128xf32> to vector<8x128xbf16>
    %c0_8 = arith.constant 0 : index
    %c0_9 = arith.constant 0 : index
    %13 = vector.load %arg5[%c0_8, %c0_9] : memref<128x128xbf16, #tpu.memory_space<vmem>>, vector<128x128xbf16>
    %cst_10 = arith.constant dense<0.000000e+00> : vector<8x128xf32>
    %14 = tpu.matmul %12, %13, %cst_10 {dimension_numbers = #tpu.dot_dimension_numbers<[1], [0], [0], [1], [0, 0, 1, 1], [], []>} : vector<8x128xbf16>, vector<128x128xbf16>, vector<8x128xf32> -> vector<8x128xf32>
    %c0_11 = arith.constant 0 : index
    %c0_12 = arith.constant 0 : index
    %15 = vector.load %arg6[%c0_11, %c0_12] : memref<1x128xf32, #tpu.memory_space<vmem>>, vector<1x128xf32>
    %16 = vector.broadcast %15 : vector<1x128xf32> to vector<8x128xf32>
    %17 = arith.addf %14, %16 : vector<8x128xf32>
    %cst_13 = arith.constant 1.000000e-01 : f32
    %18 = vector.broadcast %cst_13 : f32 to vector<8x128xf32>
    %19 = arith.mulf %18, %17 : vector<8x128xf32>
    %20 = arith.maximumf %17, %19 : vector<8x128xf32>
    %21 = arith.truncf %20 : vector<8x128xf32> to vector<8x128xbf16>
    %c0_14 = arith.constant 0 : index
    %c0_15 = arith.constant 0 : index
    %22 = vector.load %arg7[%c0_14, %c0_15] : memref<128x8xbf16, #tpu.memory_space<vmem>>, vector<128x8xbf16>
    %cst_16 = arith.constant dense<0.000000e+00> : vector<8x8xf32>
    %23 = tpu.matmul %21, %22, %cst_16 {dimension_numbers = #tpu.dot_dimension_numbers<[1], [0], [0], [1], [0, 0, 1, 1], [], []>} : vector<8x128xbf16>, vector<128x8xbf16>, vector<8x8xf32> -> vector<8x8xf32>
    %c0_17 = arith.constant 0 : index
    %c0_18 = arith.constant 0 : index
    %24 = vector.load %arg8[%c0_17, %c0_18] : memref<1x8xf32, #tpu.memory_space<vmem>>, vector<1x8xf32>
    %25 = vector.broadcast %24 : vector<1x8xf32> to vector<8x8xf32>
    %26 = arith.addf %23, %25 : vector<8x8xf32>
    %c0_19 = arith.constant 0 : index
    %c0_20 = arith.constant 0 : index
    %27 = vector.load %arg9[%c0_19, %c0_20] : memref<8x8xf32, #tpu.memory_space<vmem>>, vector<8x8xf32>
    tpu.vector_store %arg9[%c0_19, %c0_20], %26 {strides = array<i32>} : memref<8x8xf32, #tpu.memory_space<vmem>>, vector<8x8xf32>,
    return
  }
  func.func @transform_0(%arg0: i32) -> (i32, i32) {
    %c0_i32 = arith.constant 0 : i32
    %c0_i32_0 = arith.constant 0 : i32
    return %arg0, %c0_i32 : i32, i32
  }
  func.func @transform_1(%arg0: i32) -> (i32, i32) {
    %c0_i32 = arith.constant 0 : i32
    %c0_i32_0 = arith.constant 0 : i32
    return %arg0, %c0_i32 : i32, i32
  }
  func.func @transform_2(%arg0: i32) -> (i32, i32) {
    %c0_i32 = arith.constant 0 : i32
    %c0_i32_0 = arith.constant 0 : i32
    %c0_i32_1 = arith.constant 0 : i32
    return %c0_i32, %c0_i32_0 : i32, i32
  }
  func.func @transform_3(%arg0: i32) -> (i32, i32) {
    %c0_i32 = arith.constant 0 : i32
    %c0_i32_0 = arith.constant 0 : i32
    %c0_i32_1 = arith.constant 0 : i32
    return %c0_i32, %c0_i32_0 : i32, i32
  }
  func.func @transform_4(%arg0: i32) -> (i32, i32) {
    %c0_i32 = arith.constant 0 : i32
    %c0_i32_0 = arith.constant 0 : i32
    %c0_i32_1 = arith.constant 0 : i32
    return %c0_i32, %c0_i32_0 : i32, i32
  }
  func.func @transform_5(%arg0: i32) -> (i32, i32) {
    %c0_i32 = arith.constant 0 : i32
    %c0_i32_0 = arith.constant 0 : i32
    %c0_i32_1 = arith.constant 0 : i32
    return %c0_i32, %c0_i32_0 : i32, i32
  }
  func.func @transform_6(%arg0: i32) -> (i32, i32) {
    %c0_i32 = arith.constant 0 : i32
    %c0_i32_0 = arith.constant 0 : i32
    %c0_i32_1 = arith.constant 0 : i32
    return %c0_i32, %c0_i32_0 : i32, i32
  }
  func.func @transform_7(%arg0: i32) -> (i32, i32) {
    %c0_i32 = arith.constant 0 : i32
    %c0_i32_0 = arith.constant 0 : i32
    %c0_i32_1 = arith.constant 0 : i32
    return %c0_i32, %c0_i32_0 : i32, i32
  }
  func.func @transform_8(%arg0: i32) -> (i32, i32) {
    %c0_i32 = arith.constant 0 : i32
    %c0_i32_0 = arith.constant 0 : i32
    return %arg0, %c0_i32 : i32, i32
  }
}

</mosaic_0001>

<llo_original>
// kernel: position_classifier_forward.1
$region0: #{position_classifier_forward.1}
  #allocation0 [shape = 'u32[]', space=smem, size = 0x4, offset = 0x4, fixed_abs, tag = 'smem constant byte address 0x4 - core index']
  #allocation1 [shape = 'u32[72,128]{1,0:T(1,128)}', space=vmem, size = 0x9000, scoped, tag = 'internal scratch']
  %s0 = inlined_call_operand.vmem [shape: f32[16,64], index: 0, kind: input, shape index: {}]
  %s1 = inlined_call_operand.vmem [shape: f32[16,64], index: 1, kind: input, shape index: {}]
  %s2 = inlined_call_operand.vmem [shape: bf16[64,128], index: 2, kind: input, shape index: {}]
  %s3 = inlined_call_operand.vmem [shape: f32[1,128], index: 3, kind: input, shape index: {}]
  %s4 = inlined_call_operand.vmem [shape: bf16[128,128], index: 4, kind: input, shape index: {}]
  %s5 = inlined_call_operand.vmem [shape: f32[1,128], index: 5, kind: input, shape index: {}]
  %s6 = inlined_call_operand.vmem [shape: bf16[128,8], index: 6, kind: input, shape index: {}]
  %s7 = inlined_call_operand.vmem [shape: f32[1,8], index: 7, kind: input, shape index: {}]
  %s8 = inlined_call_operand.vmem [shape: f32[16,8], index: 8, kind: output, shape index: {}]
  %s9 = sld [smem:[#allocation0]]
  $region65: #{position_classifier_forward.1} parent=0
    _
  %s11 = ssub.s32 1, %s9
  %s12 = scalar_select 0, %s11, %s9
  loop: start=0, step=1, limit=4
  $region2: #{position_classifier_forward.1} parent=0 // loop_pre_header
    _
  $region3: #{position_classifier_forward.1} parent=0 // loop_header
    %s14 = sphi 0, %s18
    %p15 = scmp.ge.s32.totalorder %s14, 4
    %s24 = sphi 0, %s26
    %s27 = sphi 0, %s24
    %s28 = sphi 0, %s27
    %s44 = sphi 0, %s28
    %s50 = sphi 0, %s52
    %s53 = sphi 0, %s50
    %s54 = sphi 0, %s53
    %s70 = sphi 0, %s54
    %s74 = sphi 0, %s74
    %s76 = sphi 0, %s74
    %s77 = sphi 0, %s76
    %s91 = sphi 0, %s77
    %s95 = sphi 0, %s95
    %s97 = sphi 0, %s95
    %s98 = sphi 0, %s97
    %s112 = sphi 0, %s98
    %s116 = sphi 0, %s116
    %s118 = sphi 0, %s116
    %s119 = sphi 0, %s118
    %s133 = sphi 0, %s119
    %s137 = sphi 0, %s137
    %s139 = sphi 0, %s137
    %s140 = sphi 0, %s139
    %s154 = sphi 0, %s140
    %s158 = sphi 0, %s158
    %s160 = sphi 0, %s158
    %s161 = sphi 0, %s160
    %s175 = sphi 0, %s161
    %s179 = sphi 0, %s179
    %s181 = sphi 0, %s179
    %s182 = sphi 0, %s181
    %s196 = sphi 0, %s182
    %s202 = sphi 0, %s204
    %s205 = sphi 0, %s202
    %s206 = sphi 0, %s205
    %s222 = sphi 0, %s206
  $region4: #{position_classifier_forward.1} parent=0 // loop_header_branch
    %17 = sbr.rel (%p15) target = $region8
  $region5: #{position_classifier_forward.1} parent=0 // loop_body
    %s19 = ssub.s32 %s14, 1
    %s20 = ssub.s32 %s14, 2
    %s21 = sadd.s32 %s14, 1
    %s22 = ssub.s32 %s14, %s21
    %p23 = scmp.eq.s32.totalorder %s22, 0
    %s25 = sadd.s32 %s24, 1
    %s26 = scalar_select %p23, %s24, %s25
    %p29 = pneg %p23
    %p30 = scmp.eq.s32.totalorder %s14, 1
    %p31 = por %p29, %p30
    %p32 = scmp.ne.s32.totalorder %s24, %s27
    %p33 = scmp.eq.s32.totalorder %s14, 0
    %p34 = por %p32, %p33
    %p35 = scmp.ne.s32.totalorder %s24, %s27
    %p36 = scmp.eq.s32.totalorder %s19, 1
    %p37 = por %p35, %p36
    %p38 = scmp.ne.s32.totalorder %s27, %s28
    %p39 = scmp.eq.s32.totalorder %s19, 0
    %p40 = por %p38, %p39
    %p41 = scmp.ne.s32.totalorder %s27, %s28
    %p42 = scmp.eq.s32.totalorder %s20, 1
    %p43 = por %p41, %p42
    %p45 = scmp.ne.s32.totalorder %s28, %s44
    %p46 = scmp.eq.s32.totalorder %s20, 0
    %p47 = por %p45, %p46
    %s48 = ssub.s32 %s14, %s21
    %p49 = scmp.eq.s32.totalorder %s48, 0
    %s51 = sadd.s32 %s50, 1
    %s52 = scalar_select %p49, %s50, %s51
    %p55 = pneg %p49
    %p56 = scmp.eq.s32.totalorder %s14, 1
    %p57 = por %p55, %p56
    %p58 = scmp.ne.s32.totalorder %s50, %s53
    %p59 = scmp.eq.s32.totalorder %s14, 0
    %p60 = por %p58, %p59
    %p61 = scmp.ne.s32.totalorder %s50, %s53
    %p62 = scmp.eq.s32.totalorder %s19, 1
    %p63 = por %p61, %p62
    %p64 = scmp.ne.s32.totalorder %s53, %s54
    %p65 = scmp.eq.s32.totalorder %s19, 0
    %p66 = por %p64, %p65
    %p67 = scmp.ne.s32.totalorder %s53, %s54
    %p68 = scmp.eq.s32.totalorder %s20, 1
    %p69 = por %p67, %p68
    %p71 = scmp.ne.s32.totalorder %s54, %s70
    %p72 = scmp.eq.s32.totalorder %s20, 0
    %p73 = por %p71, %p72
    %s75 = sadd.s32 %s74, 1
    %p78 = scmp.eq.s32.totalorder %s14, 1
    %p79 = scmp.ne.s32.totalorder %s74, %s76
    %p80 = scmp.eq.s32.totalorder %s14, 0
    %p81 = por %p79, %p80
    %p82 = scmp.ne.s32.totalorder %s74, %s76
    %p83 = scmp.eq.s32.totalorder %s19, 1
    %p84 = por %p82, %p83
    %p85 = scmp.ne.s32.totalorder %s76, %s77
    %p86 = scmp.eq.s32.totalorder %s19, 0
    %p87 = por %p85, %p86
    %p88 = scmp.ne.s32.totalorder %s76, %s77
    %p89 = scmp.eq.s32.totalorder %s20, 1
    %p90 = por %p88, %p89
    %p92 = scmp.ne.s32.totalorder %s77, %s91
    %p93 = scmp.eq.s32.totalorder %s20, 0
    %p94 = por %p92, %p93
    %s96 = sadd.s32 %s95, 1
    %p99 = scmp.eq.s32.totalorder %s14, 1
    %p100 = scmp.ne.s32.totalorder %s95, %s97
    %p101 = scmp.eq.s32.totalorder %s14, 0
    %p102 = por %p100, %p101
    %p103 = scmp.ne.s32.totalorder %s95, %s97
    %p104 = scmp.eq.s32.totalorder %s19, 1
    %p105 = por %p103, %p104
    %p106 = scmp.ne.s32.totalorder %s97, %s98
    %p107 = scmp.eq.s32.totalorder %s19, 0
    %p108 = por %p106, %p107
    %p109 = scmp.ne.s32.totalorder %s97, %s98
    %p110 = scmp.eq.s32.totalorder %s20, 1
    %p111 = por %p109, %p110
    %p113 = scmp.ne.s32.totalorder %s98, %s112
    %p114 = scmp.eq.s32.totalorder %s20, 0
    %p115 = por %p113, %p114
    %s117 = sadd.s32 %s116, 1
    %p120 = scmp.eq.s32.totalorder %s14, 1
    %p121 = scmp.ne.s32.totalorder %s116, %s118
    %p122 = scmp.eq.s32.totalorder %s14, 0
    %p123 = por %p121, %p122
    %p124 = scmp.ne.s32.totalorder %s116, %s118
    %p125 = scmp.eq.s32.totalorder %s19, 1
    %p126 = por %p124, %p125
    %p127 = scmp.ne.s32.totalorder %s118, %s119
    %p128 = scmp.eq.s32.totalorder %s19, 0
    %p129 = por %p127, %p128
    %p130 = scmp.ne.s32.totalorder %s118, %s119
    %p131 = scmp.eq.s32.totalorder %s20, 1
    %p132 = por %p130, %p131
    %p134 = scmp.ne.s32.totalorder %s119, %s133
    %p135 = scmp.eq.s32.totalorder %s20, 0
    %p136 = por %p134, %p135
    %s138 = sadd.s32 %s137, 1
    %p141 = scmp.eq.s32.totalorder %s14, 1
    %p142 = scmp.ne.s32.totalorder %s137, %s139
    %p143 = scmp.eq.s32.totalorder %s14, 0
    %p144 = por %p142, %p143
    %p145 = scmp.ne.s32.totalorder %s137, %s139
    %p146 = scmp.eq.s32.totalorder %s19, 1
    %p147 = por %p145, %p146
    %p148 = scmp.ne.s32.totalorder %s139, %s140
    %p149 = scmp.eq.s32.totalorder %s19, 0
    %p150 = por %p148, %p149
    %p151 = scmp.ne.s32.totalorder %s139, %s140
    %p152 = scmp.eq.s32.totalorder %s20, 1
    %p153 = por %p151, %p152
    %p155 = scmp.ne.s32.totalorder %s140, %s154
    %p156 = scmp.eq.s32.totalorder %s20, 0
    %p157 = por %p155, %p156
    %s159 = sadd.s32 %s158, 1
    %p162 = scmp.eq.s32.totalorder %s14, 1
    %p163 = scmp.ne.s32.totalorder %s158, %s160
    %p164 = scmp.eq.s32.totalorder %s14, 0
    %p165 = por %p163, %p164
    %p166 = scmp.ne.s32.totalorder %s158, %s160
    %p167 = scmp.eq.s32.totalorder %s19, 1
    %p168 = por %p166, %p167
    %p169 = scmp.ne.s32.totalorder %s160, %s161
    %p170 = scmp.eq.s32.totalorder %s19, 0
    %p171 = por %p169, %p170
    %p172 = scmp.ne.s32.totalorder %s160, %s161
    %p173 = scmp.eq.s32.totalorder %s20, 1
    %p174 = por %p172, %p173
    %p176 = scmp.ne.s32.totalorder %s161, %s175
    %p177 = scmp.eq.s32.totalorder %s20, 0
    %p178 = por %p176, %p177
    %s180 = sadd.s32 %s179, 1
    %p183 = scmp.eq.s32.totalorder %s14, 1
    %p184 = scmp.ne.s32.totalorder %s179, %s181
    %p185 = scmp.eq.s32.totalorder %s14, 0
    %p186 = por %p184, %p185
    %p187 = scmp.ne.s32.totalorder %s179, %s181
    %p188 = scmp.eq.s32.totalorder %s19, 1
    %p189 = por %p187, %p188
    %p190 = scmp.ne.s32.totalorder %s181, %s182
    %p191 = scmp.eq.s32.totalorder %s19, 0
    %p192 = por %p190, %p191
    %p193 = scmp.ne.s32.totalorder %s181, %s182
    %p194 = scmp.eq.s32.totalorder %s20, 1
    %p195 = por %p193, %p194
    %p197 = scmp.ne.s32.totalorder %s182, %s196
    %p198 = scmp.eq.s32.totalorder %s20, 0
    %p199 = por %p197, %p198
    %s200 = ssub.s32 %s14, %s21
    %p201 = scmp.eq.s32.totalorder %s200, 0
    %s203 = sadd.s32 %s202, 1
    %s204 = scalar_select %p201, %s202, %s203
    %p207 = pneg %p201
    %p208 = scmp.eq.s32.totalorder %s14, 1
    %p209 = por %p207, %p208
    %p210 = scmp.ne.s32.totalorder %s202, %s205
    %p211 = scmp.eq.s32.totalorder %s14, 0
    %p212 = por %p210, %p211
    %p213 = scmp.ne.s32.totalorder %s202, %s205
    %p214 = scmp.eq.s32.totalorder %s19, 1
    %p215 = por %p213, %p214
    %p216 = scmp.ne.s32.totalorder %s205, %s206
    %p217 = scmp.eq.s32.totalorder %s19, 0
    %p218 = por %p216, %p217
    %p219 = scmp.ne.s32.totalorder %s205, %s206
    %p220 = scmp.eq.s32.totalorder %s20, 1
    %p221 = por %p219, %p220
    %p223 = scmp.ne.s32.totalorder %s206, %s222
    %p224 = scmp.eq.s32.totalorder %s20, 0
    %p225 = por %p223, %p224
    %p226 = scmp.le.s32.totalorder 1, %s14
    %p227 = scmp.lt.s32.totalorder %s14, 3
    %p228 = pnand %p226, %p227
    %p229 = pneg %p228
    // Predicated region
    $region9: #{position_classifier_forward.1} parent=5 // pred_check
      _
    $region10: #{position_classifier_forward.1} parent=5 // pred_check_branch
      %231 = sbr.rel (%p228) target = $region12
    $region11: #{position_classifier_forward.1} parent=5 // pred_region
      %s232 = ssub.s32 %s14, 1
      // Predicated region
      $region13: #{position_classifier_forward.1} parent=11 // pred_check
        %p233 = pneg %p87
      $region14: #{position_classifier_forward.1} parent=11 // pred_check_branch
        %235 = sbr.rel (%p233) target = $region16
      $region15: #{position_classifier_forward.1} parent=11 // pred_region
        _
      $region16: #{position_classifier_forward.1} parent=11 // pred_fallthru
        _
      // Predicated region
      $region17: #{position_classifier_forward.1} parent=11 // pred_check
        %p236 = pneg %p108
      $region18: #{position_classifier_forward.1} parent=11 // pred_check_branch
        %238 = sbr.rel (%p236) target = $region20
      $region19: #{position_classifier_forward.1} parent=11 // pred_region
        _
      $region20: #{position_classifier_forward.1} parent=11 // pred_fallthru
        _
      // Predicated region
      $region21: #{position_classifier_forward.1} parent=11 // pred_check
        %p239 = pneg %p129
      $region22: #{position_classifier_forward.1} parent=11 // pred_check_branch
        %241 = sbr.rel (%p239) target = $region24
      $region23: #{position_classifier_forward.1} parent=11 // pred_region
        _
      $region24: #{position_classifier_forward.1} parent=11 // pred_fallthru
        _
      // Predicated region
      $region25: #{position_classifier_forward.1} parent=11 // pred_check
        %p242 = pneg %p150
      $region26: #{position_classifier_forward.1} parent=11 // pred_check_branch
        %244 = sbr.rel (%p242) target = $region28
      $region27: #{position_classifier_forward.1} parent=11 // pred_region
        _
      $region28: #{position_classifier_forward.1} parent=11 // pred_fallthru
        _
      // Predicated region
      $region29: #{position_classifier_forward.1} parent=11 // pred_check
        %p245 = pneg %p171
      $region30: #{position_classifier_forward.1} parent=11 // pred_check_branch
        %247 = sbr.rel (%p245) target = $region32
      $region31: #{position_classifier_forward.1} parent=11 // pred_region
        _
      $region32: #{position_classifier_forward.1} parent=11 // pred_fallthru
        _
      // Predicated region
      $region33: #{position_classifier_forward.1} parent=11 // pred_check
        %p248 = pneg %p192
      $region34: #{position_classifier_forward.1} parent=11 // pred_check_branch
        %250 = sbr.rel (%p248) target = $region36
      $region35: #{position_classifier_forward.1} parent=11 // pred_region
        _
      $region36: #{position_classifier_forward.1} parent=11 // pred_fallthru
        _
    $region12: #{position_classifier_forward.1} parent=5 // pred_fallthru
      _
    %p251 = scmp.lt.s32.totalorder %s14, 2
    // Predicated region
    $region37: #{position_classifier_forward.1} parent=5 // pred_check
      %p252 = pneg %p251
    $region38: #{position_classifier_forward.1} parent=5 // pred_check_branch
      %254 = sbr.rel (%p252) target = $region40
    $region39: #{position_classifier_forward.1} parent=5 // pred_region
      // Predicated region
      $region41: #{position_classifier_forward.1} parent=39 // pred_check
        %p255 = pneg %p34
      $region42: #{position_classifier_forward.1} parent=39 // pred_check_branch
        %257 = sbr.rel (%p255) target = $region44
      $region43: #{position_classifier_forward.1} parent=39 // pred_region
        %p258 = scmp.lt.s32.totalorder %s14, 1
        %s259 = scalar_select %p258, %s14, 1
        %s260 = smul.addr %s259, 8
        %s261 = scalar_lea.vmem %s0, %s260
      $region44: #{position_classifier_forward.1} parent=39 // pred_fallthru
        _
      // Predicated region
      $region45: #{position_classifier_forward.1} parent=39 // pred_check
        %p262 = pneg %p60
      $region46: #{position_classifier_forward.1} parent=39 // pred_check_branch
        %264 = sbr.rel (%p262) target = $region48
      $region47: #{position_classifier_forward.1} parent=39 // pred_region
        %p265 = scmp.lt.s32.totalorder %s14, 1
        %s266 = scalar_select %p265, %s14, 1
        %s267 = smul.addr %s266, 8
        %s268 = scalar_lea.vmem %s1, %s267
      $region48: #{position_classifier_forward.1} parent=39 // pred_fallthru
        _
    $region40: #{position_classifier_forward.1} parent=5 // pred_fallthru
      _
    %p269 = scmp.le.s32.totalorder 1, %s14
    %p270 = scmp.lt.s32.totalorder %s14, 3
    %p271 = pnand %p269, %p270
    %p272 = pneg %p271
    // Predicated region
    $region49: #{position_classifier_forward.1} parent=5 // pred_check
      _
    $region50: #{position_classifier_forward.1} parent=5 // pred_check_branch
      %274 = sbr.rel (%p271) target = $region52
    $region51: #{position_classifier_forward.1} parent=5 // pred_region
      %s275 = ssub.s32 %s14, 1
      %p276 = scmp.lt.s32.totalorder %s19, 1
      %s277 = scalar_select %p276, %s19, 1
      %s278 = smul.addr %s277, 8
      %s279 = scalar_lea.vmem %s0, %s278
      %p280 = pneg %p40
      %p281 = pneg %p37
      %p282 = scmp.lt.s32.totalorder %s19, 1
      %s283 = scalar_select %p282, %s19, 1
      %s284 = smul.addr %s283, 8
      %s285 = scalar_lea.vmem %s1, %s284
      %p286 = pneg %p66
      %p287 = pneg %p63
      %p288 = pneg %p87
      %p289 = pneg %p84
      %p290 = pneg %p108
      %p291 = pneg %p105
      %p292 = pneg %p129
      %p293 = pneg %p126
      %p294 = pneg %p150
      %p295 = pneg %p147
      %p296 = pneg %p171
      %p297 = pneg %p168
      %p298 = pneg %p192
      %p299 = pneg %p189
      %p300 = pneg %p218
      %p301 = pneg %p215
      %p302 = scmp.lt.s32.totalorder %s19, 1
      %s303 = scalar_select %p302, %s19, 1
      %s304 = smul.addr %s303, 8
      %s305 = scalar_lea.vmem %s8, %s304
      %p306 = scmp.lt.s32.totalorder %s19, 1
      %s307 = scalar_select %p306, %s19, 1
      %s308 = smul.addr %s307, 8
      %s309 = scalar_lea.vmem %s0, %s308
      %p310 = scmp.lt.s32.totalorder %s19, 1
      %s311 = scalar_select %p310, %s19, 1
      %s312 = smul.addr %s311, 8
      %s313 = scalar_lea.vmem %s1, %s312
      %p314 = scmp.lt.s32.totalorder %s19, 1
      %s315 = scalar_select %p314, %s19, 1
      %s316 = smul.addr %s315, 8
      %s317 = scalar_lea.vmem %s8, %s316
      %v319 = vld [vmem:[%s309] sm:$0xff]
      %v320 = vld [vmem:[%s313] sm:$0xff]
      %v321 = vsub.f32 %v319, %v320
      %v322 = vpack.c.bf16 %v321, %v321
      %v323 = vld [vmem:[%s2] sm:$0xf]
      %v324 = vld [vmem:[%s2 + $0x4] sm:$0xf]
      %v325 = vld [vmem:[%s2 + $0x8] sm:$0xf]
      %v326 = vld [vmem:[%s2 + $0xc] sm:$0xf]
      %v327 = vld [vmem:[%s2 + $0x10] sm:$0xf]
      %v328 = vld [vmem:[%s2 + $0x14] sm:$0xf]
      %v329 = vld [vmem:[%s2 + $0x18] sm:$0xf]
      %v330 = vld [vmem:[%s2 + $0x1c] sm:$0xf]
      %v331 = vld [vmem:[%s3] sm:$0x1]
      %v333 = vperm.slane %v331, 0
      %v343 = vunpack.c.l.b16 %v323
      %v344 = vunpack.c.l.b16 %v324
      %v345 = vunpack.c.l.b16 %v325
      %v346 = vunpack.c.l.b16 %v326
      %v347 = vunpack.c.l.b16 %v327
      %v348 = vunpack.c.l.b16 %v328
      %v349 = vunpack.c.l.b16 %v329
      %v350 = vunpack.c.l.b16 %v330
      %v351 = vpack.c.b16 %v344, %v343
      %v352 = vpack.c.b16 %v346, %v345
      %v353 = vpack.c.b16 %v348, %v347
      %v354 = vpack.c.b16 %v350, %v349
      %vm359 = vcmask 523264
      %v361 = vsel %vm359, %v322, 0
      %363 = vmatpush.bf16.msra.mxu0 0
      %364 = vmatpush.bf16.msra.mxu0 0
      %365 = vmatpush.bf16.msra.mxu0 0
      %366 = vmatpush.bf16.msra.mxu0 0
      %367 = vmatpush.bf16.msra.mxu0 %v354
      %368 = vmatpush.bf16.msra.mxu0 %v353
      %369 = vmatpush.bf16.msra.mxu0 %v352
      %370 = vmatpush.bf16.msra.mxu0 %v351
      %371 = vmatmul.bf16.gmra.mxu0 %v361
      %v372 = vpop.f32.mrf.mxu0
      %v373 = vadd.f32 %v333, %v372
      %v374 = vpop.f32.mrf.mxu0
      %375 = vdwg.mxu0
      %v376 = vmul.f32 %v373, 0.1
      %v377 = vmax.f32 %v373, %v376
      %v378 = vpack.c.bf16 %v377, %v377
      %v379 = vld [vmem:[%s4] sm:$0xf]
      %v380 = vld [vmem:[%s4 + $0x4] sm:$0xf]
      %v381 = vld [vmem:[%s4 + $0x8] sm:$0xf]
      %v382 = vld [vmem:[%s4 + $0xc] sm:$0xf]
      %v383 = vld [vmem:[%s4 + $0x10] sm:$0xf]
      %v384 = vld [vmem:[%s4 + $0x14] sm:$0xf]
      %v385 = vld [vmem:[%s4 + $0x18] sm:$0xf]
      %v386 = vld [vmem:[%s4 + $0x1c] sm:$0xf]
      %v387 = vld [vmem:[%s4 + $0x20] sm:$0xf]
      %v388 = vld [vmem:[%s4 + $0x24] sm:$0xf]
      %v389 = vld [vmem:[%s4 + $0x28] sm:$0xf]
      %v390 = vld [vmem:[%s4 + $0x2c] sm:$0xf]
      %v391 = vld [vmem:[%s4 + $0x30] sm:$0xf]
      %v392 = vld [vmem:[%s4 + $0x34] sm:$0xf]
      %v393 = vld [vmem:[%s4 + $0x38] sm:$0xf]
      %v394 = vld [vmem:[%s4 + $0x3c] sm:$0xf]
      %v395 = vld [vmem:[%s5] sm:$0x1]
      %v397 = vperm.slane %v395, 0
      %v415 = vunpack.c.l.b16 %v379
      %v416 = vunpack.c.l.b16 %v380
      %v417 = vunpack.c.l.b16 %v381
      %v418 = vunpack.c.l.b16 %v382
      %v419 = vunpack.c.l.b16 %v383
      %v420 = vunpack.c.l.b16 %v384
      %v421 = vunpack.c.l.b16 %v385
      %v422 = vunpack.c.l.b16 %v386
      %v423 = vunpack.c.l.b16 %v387
      %v424 = vunpack.c.l.b16 %v388
      %v425 = vunpack.c.l.b16 %v389
      %v426 = vunpack.c.l.b16 %v390
      %v427 = vunpack.c.l.b16 %v391
      %v428 = vunpack.c.l.b16 %v392
      %v429 = vunpack.c.l.b16 %v393
      %v430 = vunpack.c.l.b16 %v394
      %v431 = vpack.c.b16 %v416, %v415
      %v432 = vpack.c.b16 %v418, %v417
      %v433 = vpack.c.b16 %v420, %v419
      %v434 = vpack.c.b16 %v422, %v421
      %v435 = vpack.c.b16 %v424, %v423
      %v436 = vpack.c.b16 %v426, %v425
      %v437 = vpack.c.b16 %v428, %v427
      %v438 = vpack.c.b16 %v430, %v429
      %447 = vmatpush.bf16.msra.mxu0 %v438
      %448 = vmatpush.bf16.msra.mxu0 %v437
      %449 = vmatpush.bf16.msra.mxu0 %v436
      %450 = vmatpush.bf16.msra.mxu0 %v435
      %451 = vmatpush.bf16.msra.mxu0 %v434
      %452 = vmatpush.bf16.msra.mxu0 %v433
      %453 = vmatpush.bf16.msra.mxu0 %v432
      %454 = vmatpush.bf16.msra.mxu0 %v431
      %455 = vmatmul.bf16.gmra.mxu0 %v378
      %v456 = vpop.f32.mrf.mxu0
      %v457 = vadd.f32 %v397, %v456
      %v458 = vpop.f32.mrf.mxu0
      %459 = vdwg.mxu0
      %v460 = vmul.f32 %v457, 0.1
      %v461 = vmax.f32 %v457, %v460
      %v462 = vpack.c.bf16 %v461, %v461
      %v463 = vld [vmem:[%s6] sm:$0xf]
      %v464 = vld [vmem:[%s6 + $0x4] sm:$0xf]
      %v465 = vld [vmem:[%s6 + $0x8] sm:$0xf]
      %v466 = vld [vmem:[%s6 + $0xc] sm:$0xf]
      %v467 = vld [vmem:[%s6 + $0x10] sm:$0xf]
      %v468 = vld [vmem:[%s6 + $0x14] sm:$0xf]
      %v469 = vld [vmem:[%s6 + $0x18] sm:$0xf]
      %v470 = vld [vmem:[%s6 + $0x1c] sm:$0xf]
      %v471 = vld [vmem:[%s6 + $0x20] sm:$0xf]
      %v472 = vld [vmem:[%s6 + $0x24] sm:$0xf]
      %v473 = vld [vmem:[%s6 + $0x28] sm:$0xf]
      %v474 = vld [vmem:[%s6 + $0x2c] sm:$0xf]
      %v475 = vld [vmem:[%s6 + $0x30] sm:$0xf]
      %v476 = vld [vmem:[%s6 + $0x34] sm:$0xf]
      %v477 = vld [vmem:[%s6 + $0x38] sm:$0xf]
      %v478 = vld [vmem:[%s6 + $0x3c] sm:$0xf]
      %v479 = vld [vmem:[%s7] sm:$0x1]
      %v481 = vperm.slane %v479, 0
      %v499 = vunpack.c.l.b16 %v463
      %v500 = vunpack.c.l.b16 %v464
      %v501 = vunpack.c.l.b16 %v465
      %v502 = vunpack.c.l.b16 %v466
      %v503 = vunpack.c.l.b16 %v467
      %v504 = vunpack.c.l.b16 %v468
      %v505 = vunpack.c.l.b16 %v469
      %v506 = vunpack.c.l.b16 %v470
      %v507 = vunpack.c.l.b16 %v471
      %v508 = vunpack.c.l.b16 %v472
      %v509 = vunpack.c.l.b16 %v473
      %v510 = vunpack.c.l.b16 %v474
      %v511 = vunpack.c.l.b16 %v475
      %v512 = vunpack.c.l.b16 %v476
      %v513 = vunpack.c.l.b16 %v477
      %v514 = vunpack.c.l.b16 %v478
      %v515 = vpack.c.b16 %v500, %v499
      %v516 = vpack.c.b16 %v502, %v501
      %v517 = vpack.c.b16 %v504, %v503
      %v518 = vpack.c.b16 %v506, %v505
      %v519 = vpack.c.b16 %v508, %v507
      %v520 = vpack.c.b16 %v510, %v509
      %v521 = vpack.c.b16 %v512, %v511
      %v522 = vpack.c.b16 %v514, %v513
      %531 = vmatpush.bf16.msra.mxu0 %v522
      %532 = vmatpush.bf16.msra.mxu0 %v521
      %533 = vmatpush.bf16.msra.mxu0 %v520
      %534 = vmatpush.bf16.msra.mxu0 %v519
      %535 = vmatpush.bf16.msra.mxu0 %v518
      %536 = vmatpush.bf16.msra.mxu0 %v517
      %537 = vmatpush.bf16.msra.mxu0 %v516
      %538 = vmatpush.bf16.msra.mxu0 %v515
      %539 = vmatmul.bf16.gmra.mxu0 %v462
      %v540 = vpop.f32.mrf.mxu0
      %v541 = vadd.f32 %v481, %v540
      %v542 = vpop.f32.mrf.mxu0
      %543 = vdwg.mxu0
      %vm544 = vcmask 64512
      %545 = vst.msk [vmem:[%s317] sm:$0xff] %vm544, %v541
      %p546 = scmp.lt.s32.totalorder %s19, 1
      %s547 = scalar_select %p546, %s19, 1
      %s548 = smul.addr %s547, 8
      %s549 = scalar_lea.vmem %s8, %s548
      // Predicated region
      $region53: #{position_classifier_forward.1} parent=51 // pred_check
        %p550 = pneg %p215
      $region54: #{position_classifier_forward.1} parent=51 // pred_check_branch
        %552 = sbr.rel (%p550) target = $region56
      $region55: #{position_classifier_forward.1} parent=51 // pred_region
        _
      $region56: #{position_classifier_forward.1} parent=51 // pred_fallthru
        _
    $region52: #{position_classifier_forward.1} parent=5 // pred_fallthru
      _
    %p553 = scmp.le.s32.totalorder 2, %s14
    // Predicated region
    $region57: #{position_classifier_forward.1} parent=5 // pred_check
      %p554 = pneg %p553
    $region58: #{position_classifier_forward.1} parent=5 // pred_check_branch
      %556 = sbr.rel (%p554) target = $region60
    $region59: #{position_classifier_forward.1} parent=5 // pred_region
      %s557 = ssub.s32 %s14, 2
      // Predicated region
      $region61: #{position_classifier_forward.1} parent=59 // pred_check
        %p558 = pneg %p221
      $region62: #{position_classifier_forward.1} parent=59 // pred_check_branch
        %560 = sbr.rel (%p558) target = $region64
      $region63: #{position_classifier_forward.1} parent=59 // pred_region
        %p561 = scmp.lt.s32.totalorder %s20, 1
        %s562 = scalar_select %p561, %s20, 1
        %s563 = smul.addr %s562, 8
        %s564 = scalar_lea.vmem %s8, %s563
      $region64: #{position_classifier_forward.1} parent=59 // pred_fallthru
        _
    $region60: #{position_classifier_forward.1} parent=5 // pred_fallthru
      _
  $region6: #{position_classifier_forward.1} parent=0 // loop_footer
    %s18 = sadd.s32 1, %s14
  $region7: #{position_classifier_forward.1} parent=0 // loop_footer_branch
    %13 = sbr.rel target = $region3
  $region8: #{position_classifier_forward.1} parent=0 // loop_exit
    _

</llo_original>
